<compile_context>
chip_gen: v5e
topology: v5e:2x2
jax: 0.10.0
libtpu: 0.0.40
codegen_flags: <defaults>
</compile_context>

<pallas_src>
import functools

import jax
import jax.numpy as jnp
from jax.experimental import pallas as pl
from jax.experimental.pallas import tpu as pltpu

_LANE = 128
_SUBLANE = 8
_NUM_LAYERS = 4


def _round_up(n, m):
    return ((n + m - 1) // m) * m


def _mlp_kernel(x_ref, w1_ref, b1_ref, w2_ref, b2_ref, w3_ref, b3_ref,
                w4_ref, b4_ref, o_ref):
    """Fused 4-layer MLP; intermediates never leave VMEM."""
    cdt = w1_ref.dtype  # compute dtype for MXU operands (bf16 or f32)

    h = x_ref[...].astype(cdt)

    # Layer 1: Linear + ReLU (f32 MXU accumulation, activation in f32)
    h = jnp.dot(h, w1_ref[...], preferred_element_type=jnp.float32) + b1_ref[...]
    h = jnp.maximum(h, 0.0).astype(cdt)

    # Layer 2: Linear + ReLU
    h = jnp.dot(h, w2_ref[...], preferred_element_type=jnp.float32) + b2_ref[...]
    h = jnp.maximum(h, 0.0).astype(cdt)

    # Layer 3: Linear + ReLU
    h = jnp.dot(h, w3_ref[...], preferred_element_type=jnp.float32) + b3_ref[...]
    h = jnp.maximum(h, 0.0).astype(cdt)

    # Layer 4: Linear (no activation)
    out = jnp.dot(h, w4_ref[...], preferred_element_type=jnp.float32) + b4_ref[...]
    o_ref[...] = out.astype(o_ref.dtype)


def prepare_params(params, compute_dtype=jnp.bfloat16):
    """One-time param prep (hoisted out of the forward).

    Interior hidden dims are zero-padded to multiples of 128 (exact: padded
    columns have zero weights + zero bias, ReLU(0)=0, and the padded rows of
    the next weight are zero). Input and output feature dims are left
    unpadded. Weights are cast to the MXU operand dtype, biases stay f32.
    """
    cdt = jnp.dtype(compute_dtype)
    prepped = {}
    for li in range(1, _NUM_LAYERS + 1):
        w = params[f"w{li}"]
        b = params[f"b{li}"]
        fi, fo = w.shape
        fip = fi if li == 1 else _round_up(fi, _LANE)            # keep d_in unpadded
        fop = fo if li == _NUM_LAYERS else _round_up(fo, _LANE)  # keep d_out unpadded
        prepped[f"w{li}"] = jnp.pad(w, ((0, fip - fi), (0, fop - fo))).astype(cdt)
        prepped[f"b{li}"] = jnp.pad(b, ((0, 0), (0, fop - fo))).astype(jnp.float32)
    return prepped


@functools.partial(jax.jit, static_argnames=("batch_tile",))
def mlp_forward(x, prepped, *, batch_tile=512):
    """x: [B, d_in]; prepped: output of prepare_params (w as [in, out], b as [1, out])."""
    B, d_in = x.shape
    assert prepped["w1"].shape[0] == d_in
    d_out = prepped[f"w{_NUM_LAYERS}"].shape[1]

    # Batch tile: multiple of 8, sized so the grid has >=4 steps when the batch
    # allows it (>=2 steps per TensorCore on v7x, so x DMA / out writeback
    # pipeline against the matmuls on both cores).
    target_steps = 4
    tile = min(batch_tile, _round_up(max(1, -(-B // target_steps)), _SUBLANE))
    tile = max(_SUBLANE, _round_up(tile, _SUBLANE))
    B_pad = _round_up(B, tile)

    # Pad batch rows only (padded rows compute garbage that is sliced off).
    x_p = x if B_pad == B else jnp.pad(x, ((0, B_pad - B), (0, 0)))

    grid = (B_pad // tile,)

    # Weights/biases: whole array resident in VMEM, loaded once, no
    # double-buffering, excluded from the per-step pipeline.
    def vmem_resident():
        return pl.BlockSpec(memory_space=pltpu.MemorySpace.VMEM)

    in_specs = [pl.BlockSpec((tile, d_in), lambda i: (i, 0))]
    flat_params = []
    for li in range(1, _NUM_LAYERS + 1):
        in_specs.append(vmem_resident())  # weight
        in_specs.append(vmem_resident())  # bias
        flat_params.append(prepped[f"w{li}"])
        flat_params.append(prepped[f"b{li}"])
    out_spec = pl.BlockSpec((tile, d_out), lambda i: (i, 0))

    # Explicit VMEM budget (instead of a hard-coded limit): double-buffered x
    # and out tiles + resident weights/biases + a few live f32 intermediates
    # of the widest (padded) layer + slack. Capped at 64 MiB (v7x physical).
    max_width = max(w.shape[1] for w in (prepped[f"w{li}"] for li in range(1, _NUM_LAYERS + 1)))
    weight_bytes = sum(int(v.size) * v.dtype.itemsize for v in flat_params)
    stream_bytes = 2 * tile * d_in * x.dtype.itemsize + 2 * tile * d_out * x.dtype.itemsize
    inter_bytes = 4 * tile * max_width * 4
    vmem_limit = weight_bytes + stream_bytes + inter_bytes + (4 << 20)
    vmem_limit = int(min(max(vmem_limit, 8 << 20), 64 << 20))

    out_padded = pl.pallas_call(
        _mlp_kernel,
        out_shape=jax.ShapeDtypeStruct((B_pad, d_out), x.dtype),
        grid_spec=pltpu.PrefetchScalarGridSpec(
            num_scalar_prefetch=0,
            grid=grid,
            in_specs=in_specs,
            out_specs=out_spec,
        ),
        compiler_params=pltpu.CompilerParams(
            dimension_semantics=("parallel",),
            vmem_limit_bytes=vmem_limit,
        ),
    )(x_p, *flat_params)

    return out_padded[:B]


def init_mlp_params(key, sizes):
    """Init mimicking PyTorch nn.Linear default (U[-1/sqrt(fan_in), +1/sqrt(fan_in)])."""
    params = {}
    for idx, (fan_in, fan_out) in enumerate(zip(sizes[:-1], sizes[1:]), start=1):
        key, kw, kb = jax.random.split(key, 3)
        bound = 1.0 / (fan_in ** 0.5)
        # stored as [in, out] (transpose of PyTorch's [out, in]) so kernel does x @ W
        params[f"w{idx}"] = jax.random.uniform(
            kw, (fan_in, fan_out), jnp.float32, minval=-bound, maxval=bound)
        params[f"b{idx}"] = jax.random.uniform(
            kb, (1, fan_out), jnp.float32, minval=-bound, maxval=bound)
    return params


def mlp_reference(x, params):
    h = x
    for idx in range(1, _NUM_LAYERS):
        h = jnp.maximum(h @ params[f"w{idx}"] + params[f"b{idx}"], 0.0)
    return h @ params[f"w{_NUM_LAYERS}"] + params[f"b{_NUM_LAYERS}"]


if __name__ == "__main__":
    # Small shapes consistent with the module: input=16, hidden=32/64/32, output=8.
    # Batch 1024 -> tile 256 -> 4-step parallel grid (2 steps per TC on v7x).
    sizes = (16, 32, 64, 32, 8)
    batch = 1024

    key = jax.random.PRNGKey(0)
    key, kx = jax.random.split(key)
    x = jax.random.normal(kx, (batch, sizes[0]), jnp.float32)
    params = init_mlp_params(key, sizes)

    ref = mlp_reference(x, params)

    # Exact-path check (f32 MXU operands).
    prepped_f32 = prepare_params(params, compute_dtype=jnp.float32)
    out_f32 = jax.block_until_ready(mlp_forward(x, prepped_f32))
    assert out_f32.shape == (batch, sizes[-1])
    assert jnp.allclose(out_f32, ref, atol=1e-4, rtol=1e-4), "f32 mismatch vs reference"

    # Default fast path (bf16 MXU operands, f32 accumulation). Note: x is also
    # rounded to bf16, an input quantization the reference does not apply.
    prepped_bf16 = prepare_params(params, compute_dtype=jnp.bfloat16)
    out_bf16 = jax.block_until_ready(mlp_forward(x, prepped_bf16))
    assert out_bf16.shape == (batch, sizes[-1])
    assert jnp.allclose(out_bf16, ref, atol=5e-2, rtol=5e-2), "bf16 mismatch vs reference"

    print("KERNEL_OK")
</pallas_src>

<mosaic_0001>
module attributes {stable_mosaic.version = 11 : i64} {
  func.func @_mlp_kernel(%arg0: i32, %arg1: memref<256x16xf32, #tpu.memory_space<vmem>>, %arg2: memref<16x128xf32, #tpu.memory_space<vmem>>, %arg3: memref<1x128xf32, #tpu.memory_space<vmem>>, %arg4: memref<128x128xf32, #tpu.memory_space<vmem>>, %arg5: memref<1x128xf32, #tpu.memory_space<vmem>>, %arg6: memref<128x128xf32, #tpu.memory_space<vmem>>, %arg7: memref<1x128xf32, #tpu.memory_space<vmem>>, %arg8: memref<128x8xf32, #tpu.memory_space<vmem>>, %arg9: memref<1x8xf32, #tpu.memory_space<vmem>>, %arg10: memref<256x8xf32, #tpu.memory_space<vmem>>) attributes {dimension_semantics = [#tpu.dimension_semantics<parallel>], iteration_bounds = array<i64: 4>, scalar_prefetch = 0 : i64, scratch_operands = 0 : i64, tpu.core_type = #tpu.core_type<tc>, window_params = [{transform_indices = @transform_0, window_bounds = array<i64: 256, 16>}, {pipeline_mode = #tpu.pipeline_mode<synchronous>, transform_indices = @transform_1, window_bounds = array<i64: 16, 128>}, {pipeline_mode = #tpu.pipeline_mode<synchronous>, transform_indices = @transform_2, window_bounds = array<i64: 1, 128>}, {pipeline_mode = #tpu.pipeline_mode<synchronous>, transform_indices = @transform_3, window_bounds = array<i64: 128, 128>}, {pipeline_mode = #tpu.pipeline_mode<synchronous>, transform_indices = @transform_4, window_bounds = array<i64: 1, 128>}, {pipeline_mode = #tpu.pipeline_mode<synchronous>, transform_indices = @transform_5, window_bounds = array<i64: 128, 128>}, {pipeline_mode = #tpu.pipeline_mode<synchronous>, transform_indices = @transform_6, window_bounds = array<i64: 1, 128>}, {pipeline_mode = #tpu.pipeline_mode<synchronous>, transform_indices = @transform_7, window_bounds = array<i64: 128, 8>}, {pipeline_mode = #tpu.pipeline_mode<synchronous>, transform_indices = @transform_8, window_bounds = array<i64: 1, 8>}, {transform_indices = @transform_9, window_bounds = array<i64: 256, 8>}]} {
    %c0 = arith.constant 0 : index
    %c0_0 = arith.constant 0 : index
    %0 = vector.load %arg1[%c0, %c0_0] : memref<256x16xf32, #tpu.memory_space<vmem>>, vector<256x16xf32>
    %c0_1 = arith.constant 0 : index
    %c0_2 = arith.constant 0 : index
    %1 = vector.load %arg2[%c0_1, %c0_2] : memref<16x128xf32, #tpu.memory_space<vmem>>, vector<16x128xf32>
    %cst = arith.constant dense<0.000000e+00> : vector<256x128xf32>
    %2 = tpu.matmul %0, %1, %cst {dimension_numbers = #tpu.dot_dimension_numbers<[1], [0], [0], [1], [0, 0, 1, 1], [], []>} : vector<256x16xf32>, vector<16x128xf32>, vector<256x128xf32> -> vector<256x128xf32>
    %c0_3 = arith.constant 0 : index
    %c0_4 = arith.constant 0 : index
    %3 = vector.load %arg3[%c0_3, %c0_4] : memref<1x128xf32, #tpu.memory_space<vmem>>, vector<1x128xf32>
    %4 = vector.broadcast %3 : vector<1x128xf32> to vector<256x128xf32>
    %5 = arith.addf %2, %4 : vector<256x128xf32>
    %cst_5 = arith.constant 0.000000e+00 : f32
    %6 = vector.broadcast %cst_5 : f32 to vector<256x128xf32>
    %7 = arith.maximumf %5, %6 : vector<256x128xf32>
    %c0_6 = arith.constant 0 : index
    %c0_7 = arith.constant 0 : index
    %8 = vector.load %arg4[%c0_6, %c0_7] : memref<128x128xf32, #tpu.memory_space<vmem>>, vector<128x128xf32>
    %cst_8 = arith.constant dense<0.000000e+00> : vector<256x128xf32>
    %9 = tpu.matmul %7, %8, %cst_8 {dimension_numbers = #tpu.dot_dimension_numbers<[1], [0], [0], [1], [0, 0, 1, 1], [], []>} : vector<256x128xf32>, vector<128x128xf32>, vector<256x128xf32> -> vector<256x128xf32>
    %c0_9 = arith.constant 0 : index
    %c0_10 = arith.constant 0 : index
    %10 = vector.load %arg5[%c0_9, %c0_10] : memref<1x128xf32, #tpu.memory_space<vmem>>, vector<1x128xf32>
    %11 = vector.broadcast %10 : vector<1x128xf32> to vector<256x128xf32>
    %12 = arith.addf %9, %11 : vector<256x128xf32>
    %cst_11 = arith.constant 0.000000e+00 : f32
    %13 = vector.broadcast %cst_11 : f32 to vector<256x128xf32>
    %14 = arith.maximumf %12, %13 : vector<256x128xf32>
    %c0_12 = arith.constant 0 : index
    %c0_13 = arith.constant 0 : index
    %15 = vector.load %arg6[%c0_12, %c0_13] : memref<128x128xf32, #tpu.memory_space<vmem>>, vector<128x128xf32>
    %cst_14 = arith.constant dense<0.000000e+00> : vector<256x128xf32>
    %16 = tpu.matmul %14, %15, %cst_14 {dimension_numbers = #tpu.dot_dimension_numbers<[1], [0], [0], [1], [0, 0, 1, 1], [], []>} : vector<256x128xf32>, vector<128x128xf32>, vector<256x128xf32> -> vector<256x128xf32>
    %c0_15 = arith.constant 0 : index
    %c0_16 = arith.constant 0 : index
    %17 = vector.load %arg7[%c0_15, %c0_16] : memref<1x128xf32, #tpu.memory_space<vmem>>, vector<1x128xf32>
    %18 = vector.broadcast %17 : vector<1x128xf32> to vector<256x128xf32>
    %19 = arith.addf %16, %18 : vector<256x128xf32>
    %cst_17 = arith.constant 0.000000e+00 : f32
    %20 = vector.broadcast %cst_17 : f32 to vector<256x128xf32>
    %21 = arith.maximumf %19, %20 : vector<256x128xf32>
    %c0_18 = arith.constant 0 : index
    %c0_19 = arith.constant 0 : index
    %22 = vector.load %arg8[%c0_18, %c0_19] : memref<128x8xf32, #tpu.memory_space<vmem>>, vector<128x8xf32>
    %cst_20 = arith.constant dense<0.000000e+00> : vector<256x8xf32>
    %23 = tpu.matmul %21, %22, %cst_20 {dimension_numbers = #tpu.dot_dimension_numbers<[1], [0], [0], [1], [0, 0, 1, 1], [], []>} : vector<256x128xf32>, vector<128x8xf32>, vector<256x8xf32> -> vector<256x8xf32>
    %c0_21 = arith.constant 0 : index
    %c0_22 = arith.constant 0 : index
    %24 = vector.load %arg9[%c0_21, %c0_22] : memref<1x8xf32, #tpu.memory_space<vmem>>, vector<1x8xf32>
    %25 = vector.broadcast %24 : vector<1x8xf32> to vector<256x8xf32>
    %26 = arith.addf %23, %25 : vector<256x8xf32>
    %c0_23 = arith.constant 0 : index
    %c0_24 = arith.constant 0 : index
    %27 = vector.load %arg10[%c0_23, %c0_24] : memref<256x8xf32, #tpu.memory_space<vmem>>, vector<256x8xf32>
    tpu.vector_store %arg10[%c0_23, %c0_24], %26 {strides = array<i32>} : memref<256x8xf32, #tpu.memory_space<vmem>>, vector<256x8xf32>,
    return
  }
  func.func @transform_0(%arg0: i32) -> (i32, i32) {
    %c0_i32 = arith.constant 0 : i32
    %c0_i32_0 = arith.constant 0 : i32
    return %arg0, %c0_i32 : i32, i32
  }
  func.func @transform_1(%arg0: i32) -> (i32, i32) {
    %c0_i32 = arith.constant 0 : i32
    %c0_i32_0 = arith.constant 0 : i32
    %c0_i32_1 = arith.constant 0 : i32
    return %c0_i32, %c0_i32_0 : i32, i32
  }
  func.func @transform_2(%arg0: i32) -> (i32, i32) {
    %c0_i32 = arith.constant 0 : i32
    %c0_i32_0 = arith.constant 0 : i32
    %c0_i32_1 = arith.constant 0 : i32
    return %c0_i32, %c0_i32_0 : i32, i32
  }
  func.func @transform_3(%arg0: i32) -> (i32, i32) {
    %c0_i32 = arith.constant 0 : i32
    %c0_i32_0 = arith.constant 0 : i32
    %c0_i32_1 = arith.constant 0 : i32
    return %c0_i32, %c0_i32_0 : i32, i32
  }
  func.func @transform_4(%arg0: i32) -> (i32, i32) {
    %c0_i32 = arith.constant 0 : i32
    %c0_i32_0 = arith.constant 0 : i32
    %c0_i32_1 = arith.constant 0 : i32
    return %c0_i32, %c0_i32_0 : i32, i32
  }
  func.func @transform_5(%arg0: i32) -> (i32, i32) {
    %c0_i32 = arith.constant 0 : i32
    %c0_i32_0 = arith.constant 0 : i32
    %c0_i32_1 = arith.constant 0 : i32
    return %c0_i32, %c0_i32_0 : i32, i32
  }
  func.func @transform_6(%arg0: i32) -> (i32, i32) {
    %c0_i32 = arith.constant 0 : i32
    %c0_i32_0 = arith.constant 0 : i32
    %c0_i32_1 = arith.constant 0 : i32
    return %c0_i32, %c0_i32_0 : i32, i32
  }
  func.func @transform_7(%arg0: i32) -> (i32, i32) {
    %c0_i32 = arith.constant 0 : i32
    %c0_i32_0 = arith.constant 0 : i32
    %c0_i32_1 = arith.constant 0 : i32
    return %c0_i32, %c0_i32_0 : i32, i32
  }
  func.func @transform_8(%arg0: i32) -> (i32, i32) {
    %c0_i32 = arith.constant 0 : i32
    %c0_i32_0 = arith.constant 0 : i32
    %c0_i32_1 = arith.constant 0 : i32
    return %c0_i32, %c0_i32_0 : i32, i32
  }
  func.func @transform_9(%arg0: i32) -> (i32, i32) {
    %c0_i32 = arith.constant 0 : i32
    %c0_i32_0 = arith.constant 0 : i32
    return %arg0, %c0_i32 : i32, i32
  }
}

</mosaic_0001>

<llo_original>
// kernel: mlp_forward.1
$region0: #{mlp_forward.1}
  #allocation0 [shape = 'u32[]', space=smem, size = 0x4, offset = 0x4, fixed_abs, tag = 'smem constant byte address 0x4 - core index']
  #allocation1 [shape = 'u32[72,128]{1,0:T(1,128)}', space=vmem, size = 0x9000, scoped, tag = 'internal scratch']
  %s0 = inlined_call_operand.vmem [shape: f32[1024,16], index: 0, kind: input, shape index: {}]
  %s1 = inlined_call_operand.vmem [shape: f32[16,128], index: 1, kind: input, shape index: {}]
  %s2 = inlined_call_operand.vmem [shape: f32[1,128], index: 2, kind: input, shape index: {}]
  %s3 = inlined_call_operand.vmem [shape: f32[128,128], index: 3, kind: input, shape index: {}]
  %s4 = inlined_call_operand.vmem [shape: f32[1,128], index: 4, kind: input, shape index: {}]
  %s5 = inlined_call_operand.vmem [shape: f32[128,128], index: 5, kind: input, shape index: {}]
  %s6 = inlined_call_operand.vmem [shape: f32[1,128], index: 6, kind: input, shape index: {}]
  %s7 = inlined_call_operand.vmem [shape: f32[128,8], index: 7, kind: input, shape index: {}]
  %s8 = inlined_call_operand.vmem [shape: f32[1,8], index: 8, kind: input, shape index: {}]
  %s9 = inlined_call_operand.vmem [shape: f32[1024,8], index: 9, kind: output, shape index: {}]
  %s10 = sld [smem:[#allocation0]]
  $region69: #{mlp_forward.1} parent=0
    _
  %s12 = ssub.s32 1, %s10
  %s13 = scalar_select 0, %s12, %s10
  loop: start=0, step=1, limit=6
  $region2: #{mlp_forward.1} parent=0 // loop_pre_header
    _
  $region3: #{mlp_forward.1} parent=0 // loop_header
    %s15 = sphi 0, %s19
    %p16 = scmp.ge.s32.totalorder %s15, 6
    %s25 = sphi 0, %s27
    %s28 = sphi 0, %s25
    %s29 = sphi 0, %s28
    %s45 = sphi 0, %s29
    %s49 = sphi 0, %s49
    %s51 = sphi 0, %s49
    %s52 = sphi 0, %s51
    %s66 = sphi 0, %s52
    %s70 = sphi 0, %s70
    %s72 = sphi 0, %s70
    %s73 = sphi 0, %s72
    %s87 = sphi 0, %s73
    %s91 = sphi 0, %s91
    %s93 = sphi 0, %s91
    %s94 = sphi 0, %s93
    %s108 = sphi 0, %s94
    %s112 = sphi 0, %s112
    %s114 = sphi 0, %s112
    %s115 = sphi 0, %s114
    %s129 = sphi 0, %s115
    %s133 = sphi 0, %s133
    %s135 = sphi 0, %s133
    %s136 = sphi 0, %s135
    %s150 = sphi 0, %s136
    %s154 = sphi 0, %s154
    %s156 = sphi 0, %s154
    %s157 = sphi 0, %s156
    %s171 = sphi 0, %s157
    %s175 = sphi 0, %s175
    %s177 = sphi 0, %s175
    %s178 = sphi 0, %s177
    %s192 = sphi 0, %s178
    %s196 = sphi 0, %s196
    %s198 = sphi 0, %s196
    %s199 = sphi 0, %s198
    %s213 = sphi 0, %s199
    %s219 = sphi 0, %s221
    %s222 = sphi 0, %s219
    %s223 = sphi 0, %s222
    %s239 = sphi 0, %s223
  $region4: #{mlp_forward.1} parent=0 // loop_header_branch
    %18 = sbr.rel (%p16) target = $region8
  $region5: #{mlp_forward.1} parent=0 // loop_body
    %s20 = ssub.s32 %s15, 1
    %s21 = ssub.s32 %s15, 2
    %s22 = sadd.s32 %s15, 1
    %s23 = ssub.s32 %s15, %s22
    %p24 = scmp.eq.s32.totalorder %s23, 0
    %s26 = sadd.s32 %s25, 1
    %s27 = scalar_select %p24, %s25, %s26
    %p30 = pneg %p24
    %p31 = scmp.eq.s32.totalorder %s15, 3
    %p32 = por %p30, %p31
    %p33 = scmp.ne.s32.totalorder %s25, %s28
    %p34 = scmp.eq.s32.totalorder %s15, 0
    %p35 = por %p33, %p34
    %p36 = scmp.ne.s32.totalorder %s25, %s28
    %p37 = scmp.eq.s32.totalorder %s20, 3
    %p38 = por %p36, %p37
    %p39 = scmp.ne.s32.totalorder %s28, %s29
    %p40 = scmp.eq.s32.totalorder %s20, 0
    %p41 = por %p39, %p40
    %p42 = scmp.ne.s32.totalorder %s28, %s29
    %p43 = scmp.eq.s32.totalorder %s21, 3
    %p44 = por %p42, %p43
    %p46 = scmp.ne.s32.totalorder %s29, %s45
    %p47 = scmp.eq.s32.totalorder %s21, 0
    %p48 = por %p46, %p47
    %s50 = sadd.s32 %s49, 1
    %p53 = scmp.eq.s32.totalorder %s15, 3
    %p54 = scmp.ne.s32.totalorder %s49, %s51
    %p55 = scmp.eq.s32.totalorder %s15, 0
    %p56 = por %p54, %p55
    %p57 = scmp.ne.s32.totalorder %s49, %s51
    %p58 = scmp.eq.s32.totalorder %s20, 3
    %p59 = por %p57, %p58
    %p60 = scmp.ne.s32.totalorder %s51, %s52
    %p61 = scmp.eq.s32.totalorder %s20, 0
    %p62 = por %p60, %p61
    %p63 = scmp.ne.s32.totalorder %s51, %s52
    %p64 = scmp.eq.s32.totalorder %s21, 3
    %p65 = por %p63, %p64
    %p67 = scmp.ne.s32.totalorder %s52, %s66
    %p68 = scmp.eq.s32.totalorder %s21, 0
    %p69 = por %p67, %p68
    %s71 = sadd.s32 %s70, 1
    %p74 = scmp.eq.s32.totalorder %s15, 3
    %p75 = scmp.ne.s32.totalorder %s70, %s72
    %p76 = scmp.eq.s32.totalorder %s15, 0
    %p77 = por %p75, %p76
    %p78 = scmp.ne.s32.totalorder %s70, %s72
    %p79 = scmp.eq.s32.totalorder %s20, 3
    %p80 = por %p78, %p79
    %p81 = scmp.ne.s32.totalorder %s72, %s73
    %p82 = scmp.eq.s32.totalorder %s20, 0
    %p83 = por %p81, %p82
    %p84 = scmp.ne.s32.totalorder %s72, %s73
    %p85 = scmp.eq.s32.totalorder %s21, 3
    %p86 = por %p84, %p85
    %p88 = scmp.ne.s32.totalorder %s73, %s87
    %p89 = scmp.eq.s32.totalorder %s21, 0
    %p90 = por %p88, %p89
    %s92 = sadd.s32 %s91, 1
    %p95 = scmp.eq.s32.totalorder %s15, 3
    %p96 = scmp.ne.s32.totalorder %s91, %s93
    %p97 = scmp.eq.s32.totalorder %s15, 0
    %p98 = por %p96, %p97
    %p99 = scmp.ne.s32.totalorder %s91, %s93
    %p100 = scmp.eq.s32.totalorder %s20, 3
    %p101 = por %p99, %p100
    %p102 = scmp.ne.s32.totalorder %s93, %s94
    %p103 = scmp.eq.s32.totalorder %s20, 0
    %p104 = por %p102, %p103
    %p105 = scmp.ne.s32.totalorder %s93, %s94
    %p106 = scmp.eq.s32.totalorder %s21, 3
    %p107 = por %p105, %p106
    %p109 = scmp.ne.s32.totalorder %s94, %s108
    %p110 = scmp.eq.s32.totalorder %s21, 0
    %p111 = por %p109, %p110
    %s113 = sadd.s32 %s112, 1
    %p116 = scmp.eq.s32.totalorder %s15, 3
    %p117 = scmp.ne.s32.totalorder %s112, %s114
    %p118 = scmp.eq.s32.totalorder %s15, 0
    %p119 = por %p117, %p118
    %p120 = scmp.ne.s32.totalorder %s112, %s114
    %p121 = scmp.eq.s32.totalorder %s20, 3
    %p122 = por %p120, %p121
    %p123 = scmp.ne.s32.totalorder %s114, %s115
    %p124 = scmp.eq.s32.totalorder %s20, 0
    %p125 = por %p123, %p124
    %p126 = scmp.ne.s32.totalorder %s114, %s115
    %p127 = scmp.eq.s32.totalorder %s21, 3
    %p128 = por %p126, %p127
    %p130 = scmp.ne.s32.totalorder %s115, %s129
    %p131 = scmp.eq.s32.totalorder %s21, 0
    %p132 = por %p130, %p131
    %s134 = sadd.s32 %s133, 1
    %p137 = scmp.eq.s32.totalorder %s15, 3
    %p138 = scmp.ne.s32.totalorder %s133, %s135
    %p139 = scmp.eq.s32.totalorder %s15, 0
    %p140 = por %p138, %p139
    %p141 = scmp.ne.s32.totalorder %s133, %s135
    %p142 = scmp.eq.s32.totalorder %s20, 3
    %p143 = por %p141, %p142
    %p144 = scmp.ne.s32.totalorder %s135, %s136
    %p145 = scmp.eq.s32.totalorder %s20, 0
    %p146 = por %p144, %p145
    %p147 = scmp.ne.s32.totalorder %s135, %s136
    %p148 = scmp.eq.s32.totalorder %s21, 3
    %p149 = por %p147, %p148
    %p151 = scmp.ne.s32.totalorder %s136, %s150
    %p152 = scmp.eq.s32.totalorder %s21, 0
    %p153 = por %p151, %p152
    %s155 = sadd.s32 %s154, 1
    %p158 = scmp.eq.s32.totalorder %s15, 3
    %p159 = scmp.ne.s32.totalorder %s154, %s156
    %p160 = scmp.eq.s32.totalorder %s15, 0
    %p161 = por %p159, %p160
    %p162 = scmp.ne.s32.totalorder %s154, %s156
    %p163 = scmp.eq.s32.totalorder %s20, 3
    %p164 = por %p162, %p163
    %p165 = scmp.ne.s32.totalorder %s156, %s157
    %p166 = scmp.eq.s32.totalorder %s20, 0
    %p167 = por %p165, %p166
    %p168 = scmp.ne.s32.totalorder %s156, %s157
    %p169 = scmp.eq.s32.totalorder %s21, 3
    %p170 = por %p168, %p169
    %p172 = scmp.ne.s32.totalorder %s157, %s171
    %p173 = scmp.eq.s32.totalorder %s21, 0
    %p174 = por %p172, %p173
    %s176 = sadd.s32 %s175, 1
    %p179 = scmp.eq.s32.totalorder %s15, 3
    %p180 = scmp.ne.s32.totalorder %s175, %s177
    %p181 = scmp.eq.s32.totalorder %s15, 0
    %p182 = por %p180, %p181
    %p183 = scmp.ne.s32.totalorder %s175, %s177
    %p184 = scmp.eq.s32.totalorder %s20, 3
    %p185 = por %p183, %p184
    %p186 = scmp.ne.s32.totalorder %s177, %s178
    %p187 = scmp.eq.s32.totalorder %s20, 0
    %p188 = por %p186, %p187
    %p189 = scmp.ne.s32.totalorder %s177, %s178
    %p190 = scmp.eq.s32.totalorder %s21, 3
    %p191 = por %p189, %p190
    %p193 = scmp.ne.s32.totalorder %s178, %s192
    %p194 = scmp.eq.s32.totalorder %s21, 0
    %p195 = por %p193, %p194
    %s197 = sadd.s32 %s196, 1
    %p200 = scmp.eq.s32.totalorder %s15, 3
    %p201 = scmp.ne.s32.totalorder %s196, %s198
    %p202 = scmp.eq.s32.totalorder %s15, 0
    %p203 = por %p201, %p202
    %p204 = scmp.ne.s32.totalorder %s196, %s198
    %p205 = scmp.eq.s32.totalorder %s20, 3
    %p206 = por %p204, %p205
    %p207 = scmp.ne.s32.totalorder %s198, %s199
    %p208 = scmp.eq.s32.totalorder %s20, 0
    %p209 = por %p207, %p208
    %p210 = scmp.ne.s32.totalorder %s198, %s199
    %p211 = scmp.eq.s32.totalorder %s21, 3
    %p212 = por %p210, %p211
    %p214 = scmp.ne.s32.totalorder %s199, %s213
    %p215 = scmp.eq.s32.totalorder %s21, 0
    %p216 = por %p214, %p215
    %s217 = ssub.s32 %s15, %s22
    %p218 = scmp.eq.s32.totalorder %s217, 0
    %s220 = sadd.s32 %s219, 1
    %s221 = scalar_select %p218, %s219, %s220
    %p224 = pneg %p218
    %p225 = scmp.eq.s32.totalorder %s15, 3
    %p226 = por %p224, %p225
    %p227 = scmp.ne.s32.totalorder %s219, %s222
    %p228 = scmp.eq.s32.totalorder %s15, 0
    %p229 = por %p227, %p228
    %p230 = scmp.ne.s32.totalorder %s219, %s222
    %p231 = scmp.eq.s32.totalorder %s20, 3
    %p232 = por %p230, %p231
    %p233 = scmp.ne.s32.totalorder %s222, %s223
    %p234 = scmp.eq.s32.totalorder %s20, 0
    %p235 = por %p233, %p234
    %p236 = scmp.ne.s32.totalorder %s222, %s223
    %p237 = scmp.eq.s32.totalorder %s21, 3
    %p238 = por %p236, %p237
    %p240 = scmp.ne.s32.totalorder %s223, %s239
    %p241 = scmp.eq.s32.totalorder %s21, 0
    %p242 = por %p240, %p241
    %p243 = scmp.le.s32.totalorder 1, %s15
    %p244 = scmp.lt.s32.totalorder %s15, 5
    %p245 = pnand %p243, %p244
    %p246 = pneg %p245
    // Predicated region
    $region9: #{mlp_forward.1} parent=5 // pred_check
      _
    $region10: #{mlp_forward.1} parent=5 // pred_check_branch
      %248 = sbr.rel (%p245) target = $region12
    $region11: #{mlp_forward.1} parent=5 // pred_region
      %s249 = ssub.s32 %s15, 1
      // Predicated region
      $region13: #{mlp_forward.1} parent=11 // pred_check
        %p250 = pneg %p62
      $region14: #{mlp_forward.1} parent=11 // pred_check_branch
        %252 = sbr.rel (%p250) target = $region16
      $region15: #{mlp_forward.1} parent=11 // pred_region
        _
      $region16: #{mlp_forward.1} parent=11 // pred_fallthru
        _
      // Predicated region
      $region17: #{mlp_forward.1} parent=11 // pred_check
        %p253 = pneg %p83
      $region18: #{mlp_forward.1} parent=11 // pred_check_branch
        %255 = sbr.rel (%p253) target = $region20
      $region19: #{mlp_forward.1} parent=11 // pred_region
        _
      $region20: #{mlp_forward.1} parent=11 // pred_fallthru
        _
      // Predicated region
      $region21: #{mlp_forward.1} parent=11 // pred_check
        %p256 = pneg %p104
      $region22: #{mlp_forward.1} parent=11 // pred_check_branch
        %258 = sbr.rel (%p256) target = $region24
      $region23: #{mlp_forward.1} parent=11 // pred_region
        _
      $region24: #{mlp_forward.1} parent=11 // pred_fallthru
        _
      // Predicated region
      $region25: #{mlp_forward.1} parent=11 // pred_check
        %p259 = pneg %p125
      $region26: #{mlp_forward.1} parent=11 // pred_check_branch
        %261 = sbr.rel (%p259) target = $region28
      $region27: #{mlp_forward.1} parent=11 // pred_region
        _
      $region28: #{mlp_forward.1} parent=11 // pred_fallthru
        _
      // Predicated region
      $region29: #{mlp_forward.1} parent=11 // pred_check
        %p262 = pneg %p146
      $region30: #{mlp_forward.1} parent=11 // pred_check_branch
        %264 = sbr.rel (%p262) target = $region32
      $region31: #{mlp_forward.1} parent=11 // pred_region
        _
      $region32: #{mlp_forward.1} parent=11 // pred_fallthru
        _
      // Predicated region
      $region33: #{mlp_forward.1} parent=11 // pred_check
        %p265 = pneg %p167
      $region34: #{mlp_forward.1} parent=11 // pred_check_branch
        %267 = sbr.rel (%p265) target = $region36
      $region35: #{mlp_forward.1} parent=11 // pred_region
        _
      $region36: #{mlp_forward.1} parent=11 // pred_fallthru
        _
      // Predicated region
      $region37: #{mlp_forward.1} parent=11 // pred_check
        %p268 = pneg %p188
      $region38: #{mlp_forward.1} parent=11 // pred_check_branch
        %270 = sbr.rel (%p268) target = $region40
      $region39: #{mlp_forward.1} parent=11 // pred_region
        _
      $region40: #{mlp_forward.1} parent=11 // pred_fallthru
        _
      // Predicated region
      $region41: #{mlp_forward.1} parent=11 // pred_check
        %p271 = pneg %p209
      $region42: #{mlp_forward.1} parent=11 // pred_check_branch
        %273 = sbr.rel (%p271) target = $region44
      $region43: #{mlp_forward.1} parent=11 // pred_region
        _
      $region44: #{mlp_forward.1} parent=11 // pred_fallthru
        _
    $region12: #{mlp_forward.1} parent=5 // pred_fallthru
      _
    %p274 = scmp.lt.s32.totalorder %s15, 4
    // Predicated region
    $region45: #{mlp_forward.1} parent=5 // pred_check
      %p275 = pneg %p274
    $region46: #{mlp_forward.1} parent=5 // pred_check_branch
      %277 = sbr.rel (%p275) target = $region48
    $region47: #{mlp_forward.1} parent=5 // pred_region
      // Predicated region
      $region49: #{mlp_forward.1} parent=47 // pred_check
        %p278 = pneg %p35
      $region50: #{mlp_forward.1} parent=47 // pred_check_branch
        %280 = sbr.rel (%p278) target = $region52
      $region51: #{mlp_forward.1} parent=47 // pred_region
        %s281 = smul.u32 32, %s15
        %p282 = scmp.lt.s32.totalorder %s281, 127
        %s283 = scalar_select %p282, %s281, 127
        %s284 = smul.addr %s283, 8
        %s285 = scalar_lea.vmem %s0, %s284
        %s286 = smul.u32 32, %s15
      $region52: #{mlp_forward.1} parent=47 // pred_fallthru
        _
    $region48: #{mlp_forward.1} parent=5 // pred_fallthru
      _
    %p287 = scmp.le.s32.totalorder 1, %s15
    %p288 = scmp.lt.s32.totalorder %s15, 5
    %p289 = pnand %p287, %p288
    %p290 = pneg %p289
    // Predicated region
    $region53: #{mlp_forward.1} parent=5 // pred_check
      _
    $region54: #{mlp_forward.1} parent=5 // pred_check_branch
      %292 = sbr.rel (%p289) target = $region56
    $region55: #{mlp_forward.1} parent=5 // pred_region
      %s293 = ssub.s32 %s15, 1
      %s294 = smul.u32 32, %s20
      %p295 = scmp.lt.s32.totalorder %s294, 127
      %s296 = scalar_select %p295, %s294, 127
      %s297 = smul.addr %s296, 8
      %s298 = scalar_lea.vmem %s0, %s297
      %p299 = pneg %p41
      %p300 = pneg %p38
      %p301 = pneg %p62
      %p302 = pneg %p59
      %p303 = pneg %p83
      %p304 = pneg %p80
      %p305 = pneg %p104
      %p306 = pneg %p101
      %p307 = pneg %p125
      %p308 = pneg %p122
      %p309 = pneg %p146
      %p310 = pneg %p143
      %p311 = pneg %p167
      %p312 = pneg %p164
      %p313 = pneg %p188
      %p314 = pneg %p185
      %p315 = pneg %p209
      %p316 = pneg %p206
      %p317 = pneg %p235
      %p318 = pneg %p232
      %s319 = smul.u32 32, %s20
      %p320 = scmp.lt.s32.totalorder %s319, 127
      %s321 = scalar_select %p320, %s319, 127
      %s322 = smul.addr %s321, 8
      %s323 = scalar_lea.vmem %s9, %s322
      %s324 = smul.u32 32, %s20
      %p325 = scmp.lt.s32.totalorder %s324, 127
      %s326 = scalar_select %p325, %s324, 127
      %s327 = smul.addr %s326, 8
      %s328 = scalar_lea.vmem %s0, %s327
      %s329 = smul.u32 32, %s20
      %s330 = smul.u32 32, %s20
      %p331 = scmp.lt.s32.totalorder %s330, 127
      %s332 = scalar_select %p331, %s330, 127
      %s333 = smul.addr %s332, 8
      %s334 = scalar_lea.vmem %s9, %s333
      %s335 = smul.u32 32, %s20
      %v336 = vld [vmem:[%s328] sm:$0xff]
      %v337 = vld [vmem:[%s328 + $0x8] sm:$0xff]
      %v338 = vld [vmem:[%s328 + $0x10] sm:$0xff]
      %v339 = vld [vmem:[%s328 + $0x18] sm:$0xff]
      %v340 = vld [vmem:[%s328 + $0x20] sm:$0xff]
      %v341 = vld [vmem:[%s328 + $0x28] sm:$0xff]
      %v342 = vld [vmem:[%s328 + $0x30] sm:$0xff]
      %v343 = vld [vmem:[%s328 + $0x38] sm:$0xff]
      %v344 = vld [vmem:[%s328 + $0x40] sm:$0xff]
      %v345 = vld [vmem:[%s328 + $0x48] sm:$0xff]
      %v346 = vld [vmem:[%s328 + $0x50] sm:$0xff]
      %v347 = vld [vmem:[%s328 + $0x58] sm:$0xff]
      %v348 = vld [vmem:[%s328 + $0x60] sm:$0xff]
      %v349 = vld [vmem:[%s328 + $0x68] sm:$0xff]
      %v350 = vld [vmem:[%s328 + $0x70] sm:$0xff]
      %v351 = vld [vmem:[%s328 + $0x78] sm:$0xff]
      %v352 = vld [vmem:[%s328 + $0x80] sm:$0xff]
      %v353 = vld [vmem:[%s328 + $0x88] sm:$0xff]
      %v354 = vld [vmem:[%s328 + $0x90] sm:$0xff]
      %v355 = vld [vmem:[%s328 + $0x98] sm:$0xff]
      %v356 = vld [vmem:[%s328 + $0xa0] sm:$0xff]
      %v357 = vld [vmem:[%s328 + $0xa8] sm:$0xff]
      %v358 = vld [vmem:[%s328 + $0xb0] sm:$0xff]
      %v359 = vld [vmem:[%s328 + $0xb8] sm:$0xff]
      %v360 = vld [vmem:[%s328 + $0xc0] sm:$0xff]
      %v361 = vld [vmem:[%s328 + $0xc8] sm:$0xff]
      %v362 = vld [vmem:[%s328 + $0xd0] sm:$0xff]
      %v363 = vld [vmem:[%s328 + $0xd8] sm:$0xff]
      %v364 = vld [vmem:[%s328 + $0xe0] sm:$0xff]
      %v365 = vld [vmem:[%s328 + $0xe8] sm:$0xff]
      %v366 = vld [vmem:[%s328 + $0xf0] sm:$0xff]
      %v367 = vld [vmem:[%s328 + $0xf8] sm:$0xff]
      %v368 = vld [vmem:[%s1] sm:$0xff]
      %v369 = vld [vmem:[%s1 + $0x8] sm:$0xff]
      %v370 = vld [vmem:[%s2] sm:$0x1]
      %v372 = vperm.slane %v370, 0
      %vm374 = vcmask 130048
      %v376 = vsel %vm374, %v336, 0
      %v379 = vsel %vm374, %v337, 0
      %v382 = vsel %vm374, %v338, 0
      %v385 = vsel %vm374, %v339, 0
      %v388 = vsel %vm374, %v340, 0
      %v391 = vsel %vm374, %v341, 0
      %v394 = vsel %vm374, %v342, 0
      %v397 = vsel %vm374, %v343, 0
      %v400 = vsel %vm374, %v344, 0
      %v403 = vsel %vm374, %v345, 0
      %v406 = vsel %vm374, %v346, 0
      %v409 = vsel %vm374, %v347, 0
      %v412 = vsel %vm374, %v348, 0
      %v415 = vsel %vm374, %v349, 0
      %v418 = vsel %vm374, %v350, 0
      %v421 = vsel %vm374, %v351, 0
      %v424 = vsel %vm374, %v352, 0
      %v427 = vsel %vm374, %v353, 0
      %v430 = vsel %vm374, %v354, 0
      %v433 = vsel %vm374, %v355, 0
      %v436 = vsel %vm374, %v356, 0
      %v439 = vsel %vm374, %v357, 0
      %v442 = vsel %vm374, %v358, 0
      %v445 = vsel %vm374, %v359, 0
      %v448 = vsel %vm374, %v360, 0
      %v451 = vsel %vm374, %v361, 0
      %v454 = vsel %vm374, %v362, 0
      %v457 = vsel %vm374, %v363, 0
      %v460 = vsel %vm374, %v364, 0
      %v463 = vsel %vm374, %v365, 0
      %v466 = vsel %vm374, %v366, 0
      %v469 = vsel %vm374, %v367, 0
      %471 = vmatpush.msra.mxu0 0.0
      %472 = vmatpush.msra.mxu0 0.0
      %473 = vmatpush.msra.mxu0 0.0
      %474 = vmatpush.msra.mxu0 0.0
      %475 = vmatpush.msra.mxu0 0.0
      %476 = vmatpush.msra.mxu0 0.0
      %477 = vmatpush.msra.mxu0 0.0
      %478 = vmatpush.msra.mxu0 0.0
      %479 = vmatpush.msra.mxu0 0.0
      %480 = vmatpush.msra.mxu0 0.0
      %481 = vmatpush.msra.mxu0 0.0
      %482 = vmatpush.msra.mxu0 0.0
      %483 = vmatpush.msra.mxu0 0.0
      %484 = vmatpush.msra.mxu0 0.0
      %485 = vmatpush.msra.mxu0 %v369
      %486 = vmatpush.msra.mxu0 %v368
      %487 = vmatmul.f32.gmra.mxu0 %v376
      %v488 = vpop.f32.mrf.mxu0
      %v489 = vadd.f32 %v372, %v488
      %490 = vmatmul.f32.gmra.mxu0 %v379
      %v491 = vpop.f32.mrf.mxu0
      %v492 = vadd.f32 %v372, %v491
      %493 = vmatmul.f32.gmra.mxu0 %v382
      %v494 = vpop.f32.mrf.mxu0
      %v495 = vadd.f32 %v372, %v494
      %496 = vmatmul.f32.gmra.mxu0 %v385
      %v497 = vpop.f32.mrf.mxu0
      %v498 = vadd.f32 %v372, %v497
      %499 = vmatmul.f32.gmra.mxu0 %v388
      %v500 = vpop.f32.mrf.mxu0
      %v501 = vadd.f32 %v372, %v500
      %502 = vmatmul.f32.gmra.mxu0 %v391
      %v503 = vpop.f32.mrf.mxu0
      %v504 = vadd.f32 %v372, %v503
      %505 = vmatmul.f32.gmra.mxu0 %v394
      %v506 = vpop.f32.mrf.mxu0
      %v507 = vadd.f32 %v372, %v506
      %508 = vmatmul.f32.gmra.mxu0 %v397
      %v509 = vpop.f32.mrf.mxu0
      %v510 = vadd.f32 %v372, %v509
      %511 = vmatmul.f32.gmra.mxu0 %v400
      %v512 = vpop.f32.mrf.mxu0
      %v513 = vadd.f32 %v372, %v512
      %514 = vmatmul.f32.gmra.mxu0 %v403
      %v515 = vpop.f32.mrf.mxu0
      %v516 = vadd.f32 %v372, %v515
      %517 = vmatmul.f32.gmra.mxu0 %v406
      %v518 = vpop.f32.mrf.mxu0
      %v519 = vadd.f32 %v372, %v518
      %520 = vmatmul.f32.gmra.mxu0 %v409
      %v521 = vpop.f32.mrf.mxu0
      %v522 = vadd.f32 %v372, %v521
      %523 = vmatmul.f32.gmra.mxu0 %v412
      %v524 = vpop.f32.mrf.mxu0
      %v525 = vadd.f32 %v372, %v524
      %526 = vmatmul.f32.gmra.mxu0 %v415
      %v527 = vpop.f32.mrf.mxu0
      %v528 = vadd.f32 %v372, %v527
      %529 = vmatmul.f32.gmra.mxu0 %v418
      %v530 = vpop.f32.mrf.mxu0
      %v531 = vadd.f32 %v372, %v530
      %532 = vmatmul.f32.gmra.mxu0 %v421
      %v533 = vpop.f32.mrf.mxu0
      %v534 = vadd.f32 %v372, %v533
      %535 = vmatmul.f32.gmra.mxu0 %v424
      %v536 = vpop.f32.mrf.mxu0
      %v537 = vadd.f32 %v372, %v536
      %538 = vmatmul.f32.gmra.mxu0 %v427
      %v539 = vpop.f32.mrf.mxu0
      %v540 = vadd.f32 %v372, %v539
      %541 = vmatmul.f32.gmra.mxu0 %v430
      %v542 = vpop.f32.mrf.mxu0
      %v543 = vadd.f32 %v372, %v542
      %544 = vmatmul.f32.gmra.mxu0 %v433
      %v545 = vpop.f32.mrf.mxu0
      %v546 = vadd.f32 %v372, %v545
      %547 = vmatmul.f32.gmra.mxu0 %v436
      %v548 = vpop.f32.mrf.mxu0
      %v549 = vadd.f32 %v372, %v548
      %550 = vmatmul.f32.gmra.mxu0 %v439
      %v551 = vpop.f32.mrf.mxu0
      %v552 = vadd.f32 %v372, %v551
      %553 = vmatmul.f32.gmra.mxu0 %v442
      %v554 = vpop.f32.mrf.mxu0
      %v555 = vadd.f32 %v372, %v554
      %556 = vmatmul.f32.gmra.mxu0 %v445
      %v557 = vpop.f32.mrf.mxu0
      %v558 = vadd.f32 %v372, %v557
      %559 = vmatmul.f32.gmra.mxu0 %v448
      %v560 = vpop.f32.mrf.mxu0
      %v561 = vadd.f32 %v372, %v560
      %562 = vmatmul.f32.gmra.mxu0 %v451
      %v563 = vpop.f32.mrf.mxu0
      %v564 = vadd.f32 %v372, %v563
      %565 = vmatmul.f32.gmra.mxu0 %v454
      %v566 = vpop.f32.mrf.mxu0
      %v567 = vadd.f32 %v372, %v566
      %568 = vmatmul.f32.gmra.mxu0 %v457
      %v569 = vpop.f32.mrf.mxu0
      %v570 = vadd.f32 %v372, %v569
      %571 = vmatmul.f32.gmra.mxu0 %v460
      %v572 = vpop.f32.mrf.mxu0
      %v573 = vadd.f32 %v372, %v572
      %574 = vmatmul.f32.gmra.mxu0 %v463
      %v575 = vpop.f32.mrf.mxu0
      %v576 = vadd.f32 %v372, %v575
      %577 = vmatmul.f32.gmra.mxu0 %v466
      %v578 = vpop.f32.mrf.mxu0
      %v579 = vadd.f32 %v372, %v578
      %580 = vmatmul.f32.gmra.mxu0 %v469
      %v581 = vpop.f32.mrf.mxu0
      %v582 = vadd.f32 %v372, %v581
      %583 = vdwg.mxu0
      %v584 = vmax.f32 %v489, 0.0
      %v585 = vmax.f32 %v492, 0.0
      %v586 = vmax.f32 %v495, 0.0
      %v587 = vmax.f32 %v498, 0.0
      %v588 = vmax.f32 %v501, 0.0
      %v589 = vmax.f32 %v504, 0.0
      %v590 = vmax.f32 %v507, 0.0
      %v591 = vmax.f32 %v510, 0.0
      %v592 = vmax.f32 %v513, 0.0
      %v593 = vmax.f32 %v516, 0.0
      %v594 = vmax.f32 %v519, 0.0
      %v595 = vmax.f32 %v522, 0.0
      %v596 = vmax.f32 %v525, 0.0
      %v597 = vmax.f32 %v528, 0.0
      %v598 = vmax.f32 %v531, 0.0
      %v599 = vmax.f32 %v534, 0.0
      %v600 = vmax.f32 %v537, 0.0
      %v601 = vmax.f32 %v540, 0.0
      %v602 = vmax.f32 %v543, 0.0
      %v603 = vmax.f32 %v546, 0.0
      %v604 = vmax.f32 %v549, 0.0
      %v605 = vmax.f32 %v552, 0.0
      %v606 = vmax.f32 %v555, 0.0
      %v607 = vmax.f32 %v558, 0.0
      %v608 = vmax.f32 %v561, 0.0
      %v609 = vmax.f32 %v564, 0.0
      %v610 = vmax.f32 %v567, 0.0
      %v611 = vmax.f32 %v570, 0.0
      %v612 = vmax.f32 %v573, 0.0
      %v613 = vmax.f32 %v576, 0.0
      %v614 = vmax.f32 %v579, 0.0
      %v615 = vmax.f32 %v582, 0.0
      %v616 = vld [vmem:[%s3] sm:$0xff]
      %v617 = vld [vmem:[%s3 + $0x8] sm:$0xff]
      %v618 = vld [vmem:[%s3 + $0x10] sm:$0xff]
      %v619 = vld [vmem:[%s3 + $0x18] sm:$0xff]
      %v620 = vld [vmem:[%s3 + $0x20] sm:$0xff]
      %v621 = vld [vmem:[%s3 + $0x28] sm:$0xff]
      %v622 = vld [vmem:[%s3 + $0x30] sm:$0xff]
      %v623 = vld [vmem:[%s3 + $0x38] sm:$0xff]
      %v624 = vld [vmem:[%s3 + $0x40] sm:$0xff]
      %v625 = vld [vmem:[%s3 + $0x48] sm:$0xff]
      %v626 = vld [vmem:[%s3 + $0x50] sm:$0xff]
      %v627 = vld [vmem:[%s3 + $0x58] sm:$0xff]
      %v628 = vld [vmem:[%s3 + $0x60] sm:$0xff]
      %v629 = vld [vmem:[%s3 + $0x68] sm:$0xff]
      %v630 = vld [vmem:[%s3 + $0x70] sm:$0xff]
      %v631 = vld [vmem:[%s3 + $0x78] sm:$0xff]
      %v632 = vld [vmem:[%s4] sm:$0x1]
      %v634 = vperm.slane %v632, 0
      %636 = vmatpush.msra.mxu0 %v631
      %637 = vmatpush.msra.mxu0 %v630
      %638 = vmatpush.msra.mxu0 %v629
      %639 = vmatpush.msra.mxu0 %v628
      %640 = vmatpush.msra.mxu0 %v627
      %641 = vmatpush.msra.mxu0 %v626
      %642 = vmatpush.msra.mxu0 %v625
      %643 = vmatpush.msra.mxu0 %v624
      %644 = vmatpush.msra.mxu0 %v623
      %645 = vmatpush.msra.mxu0 %v622
      %646 = vmatpush.msra.mxu0 %v621
      %647 = vmatpush.msra.mxu0 %v620
      %648 = vmatpush.msra.mxu0 %v619
      %649 = vmatpush.msra.mxu0 %v618
      %650 = vmatpush.msra.mxu0 %v617
      %651 = vmatpush.msra.mxu0 %v616
      %652 = vmatmul.f32.gmra.mxu0 %v584
      %v653 = vpop.f32.mrf.mxu0
      %v654 = vadd.f32 %v634, %v653
      %655 = vmatmul.f32.gmra.mxu0 %v585
      %v656 = vpop.f32.mrf.mxu0
      %v657 = vadd.f32 %v634, %v656
      %658 = vmatmul.f32.gmra.mxu0 %v586
      %v659 = vpop.f32.mrf.mxu0
      %v660 = vadd.f32 %v634, %v659
      %661 = vmatmul.f32.gmra.mxu0 %v587
      %v662 = vpop.f32.mrf.mxu0
      %v663 = vadd.f32 %v634, %v662
      %664 = vmatmul.f32.gmra.mxu0 %v588
      %v665 = vpop.f32.mrf.mxu0
      %v666 = vadd.f32 %v634, %v665
      %667 = vmatmul.f32.gmra.mxu0 %v589
      %v668 = vpop.f32.mrf.mxu0
      %v669 = vadd.f32 %v634, %v668
      %670 = vmatmul.f32.gmra.mxu0 %v590
      %v671 = vpop.f32.mrf.mxu0
      %v672 = vadd.f32 %v634, %v671
      %673 = vmatmul.f32.gmra.mxu0 %v591
      %v674 = vpop.f32.mrf.mxu0
      %v675 = vadd.f32 %v634, %v674
      %676 = vmatmul.f32.gmra.mxu0 %v592
      %v677 = vpop.f32.mrf.mxu0
      %v678 = vadd.f32 %v634, %v677
      %679 = vmatmul.f32.gmra.mxu0 %v593
      %v680 = vpop.f32.mrf.mxu0
      %v681 = vadd.f32 %v634, %v680
      %682 = vmatmul.f32.gmra.mxu0 %v594
      %v683 = vpop.f32.mrf.mxu0
      %v684 = vadd.f32 %v634, %v683
      %685 = vmatmul.f32.gmra.mxu0 %v595
      %v686 = vpop.f32.mrf.mxu0
      %v687 = vadd.f32 %v634, %v686
      %688 = vmatmul.f32.gmra.mxu0 %v596
      %v689 = vpop.f32.mrf.mxu0
      %v690 = vadd.f32 %v634, %v689
      %691 = vmatmul.f32.gmra.mxu0 %v597
      %v692 = vpop.f32.mrf.mxu0
      %v693 = vadd.f32 %v634, %v692
      %694 = vmatmul.f32.gmra.mxu0 %v598
      %v695 = vpop.f32.mrf.mxu0
      %v696 = vadd.f32 %v634, %v695
      %697 = vmatmul.f32.gmra.mxu0 %v599
      %v698 = vpop.f32.mrf.mxu0
      %v699 = vadd.f32 %v634, %v698
      %700 = vmatmul.f32.gmra.mxu0 %v600
      %v701 = vpop.f32.mrf.mxu0
      %v702 = vadd.f32 %v634, %v701
      %703 = vmatmul.f32.gmra.mxu0 %v601
      %v704 = vpop.f32.mrf.mxu0
      %v705 = vadd.f32 %v634, %v704
      %706 = vmatmul.f32.gmra.mxu0 %v602
      %v707 = vpop.f32.mrf.mxu0
      %v708 = vadd.f32 %v634, %v707
      %709 = vmatmul.f32.gmra.mxu0 %v603
      %v710 = vpop.f32.mrf.mxu0
      %v711 = vadd.f32 %v634, %v710
      %712 = vmatmul.f32.gmra.mxu0 %v604
      %v713 = vpop.f32.mrf.mxu0
      %v714 = vadd.f32 %v634, %v713
      %715 = vmatmul.f32.gmra.mxu0 %v605
      %v716 = vpop.f32.mrf.mxu0
      %v717 = vadd.f32 %v634, %v716
      %718 = vmatmul.f32.gmra.mxu0 %v606
      %v719 = vpop.f32.mrf.mxu0
      %v720 = vadd.f32 %v634, %v719
      %721 = vmatmul.f32.gmra.mxu0 %v607
      %v722 = vpop.f32.mrf.mxu0
      %v723 = vadd.f32 %v634, %v722
      %724 = vmatmul.f32.gmra.mxu0 %v608
      %v725 = vpop.f32.mrf.mxu0
      %v726 = vadd.f32 %v634, %v725
      %727 = vmatmul.f32.gmra.mxu0 %v609
      %v728 = vpop.f32.mrf.mxu0
      %v729 = vadd.f32 %v634, %v728
      %730 = vmatmul.f32.gmra.mxu0 %v610
      %v731 = vpop.f32.mrf.mxu0
      %v732 = vadd.f32 %v634, %v731
      %733 = vmatmul.f32.gmra.mxu0 %v611
      %v734 = vpop.f32.mrf.mxu0
      %v735 = vadd.f32 %v634, %v734
      %736 = vmatmul.f32.gmra.mxu0 %v612
      %v737 = vpop.f32.mrf.mxu0
      %v738 = vadd.f32 %v634, %v737
      %739 = vmatmul.f32.gmra.mxu0 %v613
      %v740 = vpop.f32.mrf.mxu0
      %v741 = vadd.f32 %v634, %v740
      %742 = vmatmul.f32.gmra.mxu0 %v614
      %v743 = vpop.f32.mrf.mxu0
      %v744 = vadd.f32 %v634, %v743
      %745 = vmatmul.f32.gmra.mxu0 %v615
      %v746 = vpop.f32.mrf.mxu0
      %v747 = vadd.f32 %v634, %v746
      %748 = vdwg.mxu0
      %v749 = vmax.f32 %v654, 0.0
      %v750 = vmax.f32 %v657, 0.0
      %v751 = vmax.f32 %v660, 0.0
      %v752 = vmax.f32 %v663, 0.0
      %v753 = vmax.f32 %v666, 0.0
      %v754 = vmax.f32 %v669, 0.0
      %v755 = vmax.f32 %v672, 0.0
      %v756 = vmax.f32 %v675, 0.0
      %v757 = vmax.f32 %v678, 0.0
      %v758 = vmax.f32 %v681, 0.0
      %v759 = vmax.f32 %v684, 0.0
      %v760 = vmax.f32 %v687, 0.0
      %v761 = vmax.f32 %v690, 0.0
      %v762 = vmax.f32 %v693, 0.0
      %v763 = vmax.f32 %v696, 0.0
      %v764 = vmax.f32 %v699, 0.0
      %v765 = vmax.f32 %v702, 0.0
      %v766 = vmax.f32 %v705, 0.0
      %v767 = vmax.f32 %v708, 0.0
      %v768 = vmax.f32 %v711, 0.0
      %v769 = vmax.f32 %v714, 0.0
      %v770 = vmax.f32 %v717, 0.0
      %v771 = vmax.f32 %v720, 0.0
      %v772 = vmax.f32 %v723, 0.0
      %v773 = vmax.f32 %v726, 0.0
      %v774 = vmax.f32 %v729, 0.0
      %v775 = vmax.f32 %v732, 0.0
      %v776 = vmax.f32 %v735, 0.0
      %v777 = vmax.f32 %v738, 0.0
      %v778 = vmax.f32 %v741, 0.0
      %v779 = vmax.f32 %v744, 0.0
      %v780 = vmax.f32 %v747, 0.0
      %v781 = vld [vmem:[%s5] sm:$0xff]
      %v782 = vld [vmem:[%s5 + $0x8] sm:$0xff]
      %v783 = vld [vmem:[%s5 + $0x10] sm:$0xff]
      %v784 = vld [vmem:[%s5 + $0x18] sm:$0xff]
      %v785 = vld [vmem:[%s5 + $0x20] sm:$0xff]
      %v786 = vld [vmem:[%s5 + $0x28] sm:$0xff]
      %v787 = vld [vmem:[%s5 + $0x30] sm:$0xff]
      %v788 = vld [vmem:[%s5 + $0x38] sm:$0xff]
      %v789 = vld [vmem:[%s5 + $0x40] sm:$0xff]
      %v790 = vld [vmem:[%s5 + $0x48] sm:$0xff]
      %v791 = vld [vmem:[%s5 + $0x50] sm:$0xff]
      %v792 = vld [vmem:[%s5 + $0x58] sm:$0xff]
      %v793 = vld [vmem:[%s5 + $0x60] sm:$0xff]
      %v794 = vld [vmem:[%s5 + $0x68] sm:$0xff]
      %v795 = vld [vmem:[%s5 + $0x70] sm:$0xff]
      %v796 = vld [vmem:[%s5 + $0x78] sm:$0xff]
      %v797 = vld [vmem:[%s6] sm:$0x1]
      %v799 = vperm.slane %v797, 0
      %801 = vmatpush.msra.mxu0 %v796
      %802 = vmatpush.msra.mxu0 %v795
      %803 = vmatpush.msra.mxu0 %v794
      %804 = vmatpush.msra.mxu0 %v793
      %805 = vmatpush.msra.mxu0 %v792
      %806 = vmatpush.msra.mxu0 %v791
      %807 = vmatpush.msra.mxu0 %v790
      %808 = vmatpush.msra.mxu0 %v789
      %809 = vmatpush.msra.mxu0 %v788
      %810 = vmatpush.msra.mxu0 %v787
      %811 = vmatpush.msra.mxu0 %v786
      %812 = vmatpush.msra.mxu0 %v785
      %813 = vmatpush.msra.mxu0 %v784
      %814 = vmatpush.msra.mxu0 %v783
      %815 = vmatpush.msra.mxu0 %v782
      %816 = vmatpush.msra.mxu0 %v781
      %817 = vmatmul.f32.gmra.mxu0 %v749
      %v818 = vpop.f32.mrf.mxu0
      %v819 = vadd.f32 %v799, %v818
      %820 = vmatmul.f32.gmra.mxu0 %v750
      %v821 = vpop.f32.mrf.mxu0
      %v822 = vadd.f32 %v799, %v821
      %823 = vmatmul.f32.gmra.mxu0 %v751
      %v824 = vpop.f32.mrf.mxu0
      %v825 = vadd.f32 %v799, %v824
      %826 = vmatmul.f32.gmra.mxu0 %v752
      %v827 = vpop.f32.mrf.mxu0
      %v828 = vadd.f32 %v799, %v827
      %829 = vmatmul.f32.gmra.mxu0 %v753
      %v830 = vpop.f32.mrf.mxu0
      %v831 = vadd.f32 %v799, %v830
      %832 = vmatmul.f32.gmra.mxu0 %v754
      %v833 = vpop.f32.mrf.mxu0
      %v834 = vadd.f32 %v799, %v833
      %835 = vmatmul.f32.gmra.mxu0 %v755
      %v836 = vpop.f32.mrf.mxu0
      %v837 = vadd.f32 %v799, %v836
      %838 = vmatmul.f32.gmra.mxu0 %v756
      %v839 = vpop.f32.mrf.mxu0
      %v840 = vadd.f32 %v799, %v839
      %841 = vmatmul.f32.gmra.mxu0 %v757
      %v842 = vpop.f32.mrf.mxu0
      %v843 = vadd.f32 %v799, %v842
      %844 = vmatmul.f32.gmra.mxu0 %v758
      %v845 = vpop.f32.mrf.mxu0
      %v846 = vadd.f32 %v799, %v845
      %847 = vmatmul.f32.gmra.mxu0 %v759
      %v848 = vpop.f32.mrf.mxu0
      %v849 = vadd.f32 %v799, %v848
      %850 = vmatmul.f32.gmra.mxu0 %v760
      %v851 = vpop.f32.mrf.mxu0
      %v852 = vadd.f32 %v799, %v851
      %853 = vmatmul.f32.gmra.mxu0 %v761
      %v854 = vpop.f32.mrf.mxu0
      %v855 = vadd.f32 %v799, %v854
      %856 = vmatmul.f32.gmra.mxu0 %v762
      %v857 = vpop.f32.mrf.mxu0
      %v858 = vadd.f32 %v799, %v857
      %859 = vmatmul.f32.gmra.mxu0 %v763
      %v860 = vpop.f32.mrf.mxu0
      %v861 = vadd.f32 %v799, %v860
      %862 = vmatmul.f32.gmra.mxu0 %v764
      %v863 = vpop.f32.mrf.mxu0
      %v864 = vadd.f32 %v799, %v863
      %865 = vmatmul.f32.gmra.mxu0 %v765
      %v866 = vpop.f32.mrf.mxu0
      %v867 = vadd.f32 %v799, %v866
      %868 = vmatmul.f32.gmra.mxu0 %v766
      %v869 = vpop.f32.mrf.mxu0
      %v870 = vadd.f32 %v799, %v869
      %871 = vmatmul.f32.gmra.mxu0 %v767
      %v872 = vpop.f32.mrf.mxu0
      %v873 = vadd.f32 %v799, %v872
      %874 = vmatmul.f32.gmra.mxu0 %v768
      %v875 = vpop.f32.mrf.mxu0
      %v876 = vadd.f32 %v799, %v875
      %877 = vmatmul.f32.gmra.mxu0 %v769
      %v878 = vpop.f32.mrf.mxu0
      %v879 = vadd.f32 %v799, %v878
      %880 = vmatmul.f32.gmra.mxu0 %v770
      %v881 = vpop.f32.mrf.mxu0
      %v882 = vadd.f32 %v799, %v881
      %883 = vmatmul.f32.gmra.mxu0 %v771
      %v884 = vpop.f32.mrf.mxu0
      %v885 = vadd.f32 %v799, %v884
      %886 = vmatmul.f32.gmra.mxu0 %v772
      %v887 = vpop.f32.mrf.mxu0
      %v888 = vadd.f32 %v799, %v887
      %889 = vmatmul.f32.gmra.mxu0 %v773
      %v890 = vpop.f32.mrf.mxu0
      %v891 = vadd.f32 %v799, %v890
      %892 = vmatmul.f32.gmra.mxu0 %v774
      %v893 = vpop.f32.mrf.mxu0
      %v894 = vadd.f32 %v799, %v893
      %895 = vmatmul.f32.gmra.mxu0 %v775
      %v896 = vpop.f32.mrf.mxu0
      %v897 = vadd.f32 %v799, %v896
      %898 = vmatmul.f32.gmra.mxu0 %v776
      %v899 = vpop.f32.mrf.mxu0
      %v900 = vadd.f32 %v799, %v899
      %901 = vmatmul.f32.gmra.mxu0 %v777
      %v902 = vpop.f32.mrf.mxu0
      %v903 = vadd.f32 %v799, %v902
      %904 = vmatmul.f32.gmra.mxu0 %v778
      %v905 = vpop.f32.mrf.mxu0
      %v906 = vadd.f32 %v799, %v905
      %907 = vmatmul.f32.gmra.mxu0 %v779
      %v908 = vpop.f32.mrf.mxu0
      %v909 = vadd.f32 %v799, %v908
      %910 = vmatmul.f32.gmra.mxu0 %v780
      %v911 = vpop.f32.mrf.mxu0
      %v912 = vadd.f32 %v799, %v911
      %913 = vdwg.mxu0
      %v914 = vmax.f32 %v819, 0.0
      %v915 = vmax.f32 %v822, 0.0
      %v916 = vmax.f32 %v825, 0.0
      %v917 = vmax.f32 %v828, 0.0
      %v918 = vmax.f32 %v831, 0.0
      %v919 = vmax.f32 %v834, 0.0
      %v920 = vmax.f32 %v837, 0.0
      %v921 = vmax.f32 %v840, 0.0
      %v922 = vmax.f32 %v843, 0.0
      %v923 = vmax.f32 %v846, 0.0
      %v924 = vmax.f32 %v849, 0.0
      %v925 = vmax.f32 %v852, 0.0
      %v926 = vmax.f32 %v855, 0.0
      %v927 = vmax.f32 %v858, 0.0
      %v928 = vmax.f32 %v861, 0.0
      %v929 = vmax.f32 %v864, 0.0
      %v930 = vmax.f32 %v867, 0.0
      %v931 = vmax.f32 %v870, 0.0
      %v932 = vmax.f32 %v873, 0.0
      %v933 = vmax.f32 %v876, 0.0
      %v934 = vmax.f32 %v879, 0.0
      %v935 = vmax.f32 %v882, 0.0
      %v936 = vmax.f32 %v885, 0.0
      %v937 = vmax.f32 %v888, 0.0
      %v938 = vmax.f32 %v891, 0.0
      %v939 = vmax.f32 %v894, 0.0
      %v940 = vmax.f32 %v897, 0.0
      %v941 = vmax.f32 %v900, 0.0
      %v942 = vmax.f32 %v903, 0.0
      %v943 = vmax.f32 %v906, 0.0
      %v944 = vmax.f32 %v909, 0.0
      %v945 = vmax.f32 %v912, 0.0
      %v946 = vld [vmem:[%s7] sm:$0xff]
      %v947 = vld [vmem:[%s7 + $0x8] sm:$0xff]
      %v948 = vld [vmem:[%s7 + $0x10] sm:$0xff]
      %v949 = vld [vmem:[%s7 + $0x18] sm:$0xff]
      %v950 = vld [vmem:[%s7 + $0x20] sm:$0xff]
      %v951 = vld [vmem:[%s7 + $0x28] sm:$0xff]
      %v952 = vld [vmem:[%s7 + $0x30] sm:$0xff]
      %v953 = vld [vmem:[%s7 + $0x38] sm:$0xff]
      %v954 = vld [vmem:[%s7 + $0x40] sm:$0xff]
      %v955 = vld [vmem:[%s7 + $0x48] sm:$0xff]
      %v956 = vld [vmem:[%s7 + $0x50] sm:$0xff]
      %v957 = vld [vmem:[%s7 + $0x58] sm:$0xff]
      %v958 = vld [vmem:[%s7 + $0x60] sm:$0xff]
      %v959 = vld [vmem:[%s7 + $0x68] sm:$0xff]
      %v960 = vld [vmem:[%s7 + $0x70] sm:$0xff]
      %v961 = vld [vmem:[%s7 + $0x78] sm:$0xff]
      %v962 = vld [vmem:[%s8] sm:$0x1]
      %v964 = vperm.slane %v962, 0
      %966 = vmatpush.msra.mxu0 %v961
      %967 = vmatpush.msra.mxu0 %v960
      %968 = vmatpush.msra.mxu0 %v959
      %969 = vmatpush.msra.mxu0 %v958
      %970 = vmatpush.msra.mxu0 %v957
      %971 = vmatpush.msra.mxu0 %v956
      %972 = vmatpush.msra.mxu0 %v955
      %973 = vmatpush.msra.mxu0 %v954
      %974 = vmatpush.msra.mxu0 %v953
      %975 = vmatpush.msra.mxu0 %v952
      %976 = vmatpush.msra.mxu0 %v951
      %977 = vmatpush.msra.mxu0 %v950
      %978 = vmatpush.msra.mxu0 %v949
      %979 = vmatpush.msra.mxu0 %v948
      %980 = vmatpush.msra.mxu0 %v947
      %981 = vmatpush.msra.mxu0 %v946
      %982 = vmatmul.f32.gmra.mxu0 %v914
      %v983 = vpop.f32.mrf.mxu0
      %v984 = vadd.f32 %v964, %v983
      %985 = vmatmul.f32.gmra.mxu0 %v915
      %v986 = vpop.f32.mrf.mxu0
      %v987 = vadd.f32 %v964, %v986
      %988 = vmatmul.f32.gmra.mxu0 %v916
      %v989 = vpop.f32.mrf.mxu0
      %v990 = vadd.f32 %v964, %v989
      %991 = vmatmul.f32.gmra.mxu0 %v917
      %v992 = vpop.f32.mrf.mxu0
      %v993 = vadd.f32 %v964, %v992
      %994 = vmatmul.f32.gmra.mxu0 %v918
      %v995 = vpop.f32.mrf.mxu0
      %v996 = vadd.f32 %v964, %v995
      %997 = vmatmul.f32.gmra.mxu0 %v919
      %v998 = vpop.f32.mrf.mxu0
      %v999 = vadd.f32 %v964, %v998
      %1000 = vmatmul.f32.gmra.mxu0 %v920
      %v1001 = vpop.f32.mrf.mxu0
      %v1002 = vadd.f32 %v964, %v1001
      %1003 = vmatmul.f32.gmra.mxu0 %v921
      %v1004 = vpop.f32.mrf.mxu0
      %v1005 = vadd.f32 %v964, %v1004
      %1006 = vmatmul.f32.gmra.mxu0 %v922
      %v1007 = vpop.f32.mrf.mxu0
      %v1008 = vadd.f32 %v964, %v1007
      %1009 = vmatmul.f32.gmra.mxu0 %v923
      %v1010 = vpop.f32.mrf.mxu0
      %v1011 = vadd.f32 %v964, %v1010
      %1012 = vmatmul.f32.gmra.mxu0 %v924
      %v1013 = vpop.f32.mrf.mxu0
      %v1014 = vadd.f32 %v964, %v1013
      %1015 = vmatmul.f32.gmra.mxu0 %v925
      %v1016 = vpop.f32.mrf.mxu0
      %v1017 = vadd.f32 %v964, %v1016
      %1018 = vmatmul.f32.gmra.mxu0 %v926
      %v1019 = vpop.f32.mrf.mxu0
      %v1020 = vadd.f32 %v964, %v1019
      %1021 = vmatmul.f32.gmra.mxu0 %v927
      %v1022 = vpop.f32.mrf.mxu0
      %v1023 = vadd.f32 %v964, %v1022
      %1024 = vmatmul.f32.gmra.mxu0 %v928
      %v1025 = vpop.f32.mrf.mxu0
      %v1026 = vadd.f32 %v964, %v1025
      %1027 = vmatmul.f32.gmra.mxu0 %v929
      %v1028 = vpop.f32.mrf.mxu0
      %v1029 = vadd.f32 %v964, %v1028
      %1030 = vmatmul.f32.gmra.mxu0 %v930
      %v1031 = vpop.f32.mrf.mxu0
      %v1032 = vadd.f32 %v964, %v1031
      %1033 = vmatmul.f32.gmra.mxu0 %v931
      %v1034 = vpop.f32.mrf.mxu0
      %v1035 = vadd.f32 %v964, %v1034
      %1036 = vmatmul.f32.gmra.mxu0 %v932
      %v1037 = vpop.f32.mrf.mxu0
      %v1038 = vadd.f32 %v964, %v1037
      %1039 = vmatmul.f32.gmra.mxu0 %v933
      %v1040 = vpop.f32.mrf.mxu0
      %v1041 = vadd.f32 %v964, %v1040
      %1042 = vmatmul.f32.gmra.mxu0 %v934
      %v1043 = vpop.f32.mrf.mxu0
      %v1044 = vadd.f32 %v964, %v1043
      %1045 = vmatmul.f32.gmra.mxu0 %v935
      %v1046 = vpop.f32.mrf.mxu0
      %v1047 = vadd.f32 %v964, %v1046
      %1048 = vmatmul.f32.gmra.mxu0 %v936
      %v1049 = vpop.f32.mrf.mxu0
      %v1050 = vadd.f32 %v964, %v1049
      %1051 = vmatmul.f32.gmra.mxu0 %v937
      %v1052 = vpop.f32.mrf.mxu0
      %v1053 = vadd.f32 %v964, %v1052
      %1054 = vmatmul.f32.gmra.mxu0 %v938
      %v1055 = vpop.f32.mrf.mxu0
      %v1056 = vadd.f32 %v964, %v1055
      %1057 = vmatmul.f32.gmra.mxu0 %v939
      %v1058 = vpop.f32.mrf.mxu0
      %v1059 = vadd.f32 %v964, %v1058
      %1060 = vmatmul.f32.gmra.mxu0 %v940
      %v1061 = vpop.f32.mrf.mxu0
      %v1062 = vadd.f32 %v964, %v1061
      %1063 = vmatmul.f32.gmra.mxu0 %v941
      %v1064 = vpop.f32.mrf.mxu0
      %v1065 = vadd.f32 %v964, %v1064
      %1066 = vmatmul.f32.gmra.mxu0 %v942
      %v1067 = vpop.f32.mrf.mxu0
      %v1068 = vadd.f32 %v964, %v1067
      %1069 = vmatmul.f32.gmra.mxu0 %v943
      %v1070 = vpop.f32.mrf.mxu0
      %v1071 = vadd.f32 %v964, %v1070
      %1072 = vmatmul.f32.gmra.mxu0 %v944
      %v1073 = vpop.f32.mrf.mxu0
      %v1074 = vadd.f32 %v964, %v1073
      %1075 = vmatmul.f32.gmra.mxu0 %v945
      %v1076 = vpop.f32.mrf.mxu0
      %v1077 = vadd.f32 %v964, %v1076
      %1078 = vdwg.mxu0
      %vm1079 = vcmask 64512
      %1080 = vst.msk [vmem:[%s334] sm:$0xff] %vm1079, %v984
      %1081 = vst.msk [vmem:[%s334 + $0x8] sm:$0xff] %vm1079, %v987
      %1082 = vst.msk [vmem:[%s334 + $0x10] sm:$0xff] %vm1079, %v990
      %1083 = vst.msk [vmem:[%s334 + $0x18] sm:$0xff] %vm1079, %v993
      %1084 = vst.msk [vmem:[%s334 + $0x20] sm:$0xff] %vm1079, %v996
      %1085 = vst.msk [vmem:[%s334 + $0x28] sm:$0xff] %vm1079, %v999
      %1086 = vst.msk [vmem:[%s334 + $0x30] sm:$0xff] %vm1079, %v1002
      %1087 = vst.msk [vmem:[%s334 + $0x38] sm:$0xff] %vm1079, %v1005
      %1088 = vst.msk [vmem:[%s334 + $0x40] sm:$0xff] %vm1079, %v1008
      %1089 = vst.msk [vmem:[%s334 + $0x48] sm:$0xff] %vm1079, %v1011
      %1090 = vst.msk [vmem:[%s334 + $0x50] sm:$0xff] %vm1079, %v1014
      %1091 = vst.msk [vmem:[%s334 + $0x58] sm:$0xff] %vm1079, %v1017
      %1092 = vst.msk [vmem:[%s334 + $0x60] sm:$0xff] %vm1079, %v1020
      %1093 = vst.msk [vmem:[%s334 + $0x68] sm:$0xff] %vm1079, %v1023
      %1094 = vst.msk [vmem:[%s334 + $0x70] sm:$0xff] %vm1079, %v1026
      %1095 = vst.msk [vmem:[%s334 + $0x78] sm:$0xff] %vm1079, %v1029
      %1096 = vst.msk [vmem:[%s334 + $0x80] sm:$0xff] %vm1079, %v1032
      %1097 = vst.msk [vmem:[%s334 + $0x88] sm:$0xff] %vm1079, %v1035
      %1098 = vst.msk [vmem:[%s334 + $0x90] sm:$0xff] %vm1079, %v1038
      %1099 = vst.msk [vmem:[%s334 + $0x98] sm:$0xff] %vm1079, %v1041
      %1100 = vst.msk [vmem:[%s334 + $0xa0] sm:$0xff] %vm1079, %v1044
      %1101 = vst.msk [vmem:[%s334 + $0xa8] sm:$0xff] %vm1079, %v1047
      %1102 = vst.msk [vmem:[%s334 + $0xb0] sm:$0xff] %vm1079, %v1050
      %1103 = vst.msk [vmem:[%s334 + $0xb8] sm:$0xff] %vm1079, %v1053
      %1104 = vst.msk [vmem:[%s334 + $0xc0] sm:$0xff] %vm1079, %v1056
      %1105 = vst.msk [vmem:[%s334 + $0xc8] sm:$0xff] %vm1079, %v1059
      %1106 = vst.msk [vmem:[%s334 + $0xd0] sm:$0xff] %vm1079, %v1062
      %1107 = vst.msk [vmem:[%s334 + $0xd8] sm:$0xff] %vm1079, %v1065
      %1108 = vst.msk [vmem:[%s334 + $0xe0] sm:$0xff] %vm1079, %v1068
      %1109 = vst.msk [vmem:[%s334 + $0xe8] sm:$0xff] %vm1079, %v1071
      %1110 = vst.msk [vmem:[%s334 + $0xf0] sm:$0xff] %vm1079, %v1074
      %1111 = vst.msk [vmem:[%s334 + $0xf8] sm:$0xff] %vm1079, %v1077
      %s1112 = smul.u32 32, %s20
      %p1113 = scmp.lt.s32.totalorder %s1112, 127
      %s1114 = scalar_select %p1113, %s1112, 127
      %s1115 = smul.addr %s1114, 8
      %s1116 = scalar_lea.vmem %s9, %s1115
      // Predicated region
      $region57: #{mlp_forward.1} parent=55 // pred_check
        %p1117 = pneg %p232
      $region58: #{mlp_forward.1} parent=55 // pred_check_branch
        %1119 = sbr.rel (%p1117) target = $region60
      $region59: #{mlp_forward.1} parent=55 // pred_region
        %s1120 = smul.u32 32, %s20
      $region60: #{mlp_forward.1} parent=55 // pred_fallthru
        _
    $region56: #{mlp_forward.1} parent=5 // pred_fallthru
      _
    %p1121 = scmp.le.s32.totalorder 2, %s15
    // Predicated region
    $region61: #{mlp_forward.1} parent=5 // pred_check
      %p1122 = pneg %p1121
    $region62: #{mlp_forward.1} parent=5 // pred_check_branch
      %1124 = sbr.rel (%p1122) target = $region64
    $region63: #{mlp_forward.1} parent=5 // pred_region
      %s1125 = ssub.s32 %s15, 2
      // Predicated region
      $region65: #{mlp_forward.1} parent=63 // pred_check
        %p1126 = pneg %p238
      $region66: #{mlp_forward.1} parent=63 // pred_check_branch
        %1128 = sbr.rel (%p1126) target = $region68
      $region67: #{mlp_forward.1} parent=63 // pred_region
        %s1129 = smul.u32 32, %s21
        %p1130 = scmp.lt.s32.totalorder %s1129, 127
        %s1131 = scalar_select %p1130, %s1129, 127
        %s1132 = smul.addr %s1131, 8
        %s1133 = scalar_lea.vmem %s9, %s1132
      $region68: #{mlp_forward.1} parent=63 // pred_fallthru
        _
    $region64: #{mlp_forward.1} parent=5 // pred_fallthru
      _
  $region6: #{mlp_forward.1} parent=0 // loop_footer
    %s19 = sadd.s32 1, %s15
  $region7: #{mlp_forward.1} parent=0 // loop_footer_branch
    %14 = sbr.rel target = $region3
  $region8: #{mlp_forward.1} parent=0 // loop_exit
    _

</llo_original>
